<compile_context>
chip_gen: v5e
topology: v5e:2x2
jax: 0.10.0
libtpu: 0.0.40
codegen_flags: <defaults>
</compile_context>

<pallas_src>
import functools

import jax
import jax.numpy as jnp
from jax.experimental import pallas as pl
from jax.experimental.pallas import tpu as pltpu

BERT_DIM = 768


def _head_kernel(x_ref, w1_ref, b1_ref, w2_ref, b2_ref, o_ref):
    # x_ref:  [TB, 768] (bf16 preferred)   w1_ref: [768, H] bf16
    # b1_ref: [1, H] f32                   w2_ref: [H, O]   f32
    # b2_ref: [1, O] f32                   o_ref:  [TB, O]  f32
    x = x_ref[...]
    if x.dtype != jnp.bfloat16:
        # Only taken for f32 callers; statically absent for bf16 activations.
        x = x.astype(jnp.bfloat16)
    # First GEMM on the MXU: bf16 operands, f32 accumulation.
    h = jnp.dot(x, w1_ref[...], preferred_element_type=jnp.float32)
    # Bias + ReLU in f32 (v5e has no bf16 VPU).
    h = jnp.maximum(h + b1_ref[...], 0.0)
    # Dropout(p=0.1) is identity at inference time (module.eval()).
    # TODO(synk): training-mode dropout (PRNG mask) is not implemented.
    # Second (tiny) GEMM stays fully in f32 -- no bf16 round-trip of h.
    logits = jnp.dot(h, w2_ref[...], preferred_element_type=jnp.float32)
    o_ref[...] = (logits + b2_ref[...]).astype(o_ref.dtype)


def _pick_batch_tile(B, block_b):
    """Largest tile <= block_b that (a) is a multiple of 8 when gridded and
    (b) yields >= 2 grid steps when B >= 16 (so v7x megacore gets work)."""
    if B < 16:
        return B  # single full-extent block; no (8,) divisibility needed
    half_rounded = 8 * pl.cdiv(pl.cdiv(B, 2), 8)
    return max(8, min(block_b, half_rounded))


@functools.partial(jax.jit, static_argnames=("block_b",))
def bert_classification_head(last_hidden_state, w1, b1, w2, b2, *, block_b=1024):
    """last_hidden_state: [B, S, 768] (bf16 or f32) -> logits [B, output_dim] f32."""
    B, S, D = last_hidden_state.shape
    assert D == BERT_DIM
    H = w1.shape[1]
    O = w2.shape[1]

    # Free (contiguous) reshape; the CLS token of row b is columns [0:768).
    # The kernel's BlockSpec reads only those columns -> fused CLS slice.
    x2d = last_hidden_state.reshape(B, S * D)

    # Large weight cast once here (ideally params are already stored as bf16);
    # small tensors stay f32 so bias/ReLU/second GEMM need no in-kernel casts.
    w1_bf16 = w1.astype(jnp.bfloat16)
    b1_f32 = b1.astype(jnp.float32).reshape(1, H)
    w2_f32 = w2.astype(jnp.float32)
    b2_f32 = b2.astype(jnp.float32).reshape(1, O)

    TB = _pick_batch_tile(B, block_b)
    grid = (pl.cdiv(B, TB),)

    act_bytes = x2d.dtype.itemsize
    cost = pl.CostEstimate(
        flops=2 * B * (BERT_DIM * H + H * O),
        transcendentals=0,
        bytes_accessed=(
            B * BERT_DIM * act_bytes          # CLS activations
            + BERT_DIM * H * 2                # bf16 W1 (one-time)
            + (H + H * O + O) * 4             # b1, W2, b2
            + B * O * 4                       # logits
        ),
    )

    return pl.pallas_call(
        _head_kernel,
        out_shape=jax.ShapeDtypeStruct((B, O), jnp.float32),
        grid=grid,
        in_specs=[
            pl.BlockSpec((TB, BERT_DIM), lambda i: (i, 0)),   # CLS columns only
            pl.BlockSpec((BERT_DIM, H), lambda i: (0, 0)),    # resident bf16 W1
            pl.BlockSpec((1, H), lambda i: (0, 0)),
            pl.BlockSpec((H, O), lambda i: (0, 0)),
            pl.BlockSpec((1, O), lambda i: (0, 0)),
        ],
        out_specs=pl.BlockSpec((TB, O), lambda i: (i, 0)),
        compiler_params=pltpu.CompilerParams(
            dimension_semantics=("parallel",),
            vmem_limit_bytes=32 << 20,   # raises v5e's 16 MiB scoped default
        ),
        cost_estimate=cost,
    )(x2d, w1_bf16, b1_f32, w2_f32, b2_f32)


def _reference(last_hidden_state, w1, b1, w2, b2):
    cls_token = last_hidden_state[:, 0, :]
    h = jnp.maximum(cls_token @ w1 + b1, 0.0)
    return h @ w2 + b2


if __name__ == "__main__":
    key = jax.random.PRNGKey(0)
    k_x, k_w1, k_b1, k_w2, k_b2 = jax.random.split(key, 5)

    batch, seq, hidden_dim, output_dim = 2, 8, 32, 4

    # Synthetic BERT output (deterministic).  Real BERT trunks typically emit
    # bf16, which is the fast path for this kernel (half the activation DMA).
    last_hidden_state = jax.random.normal(
        k_x, (batch, seq, BERT_DIM), jnp.float32
    ).astype(jnp.bfloat16)

    # Parameters stored as [in, out] (transposed vs nn.Linear's [out, in]).
    w1 = jax.random.normal(k_w1, (BERT_DIM, hidden_dim), jnp.float32) * 0.02
    b1 = jax.random.normal(k_b1, (hidden_dim,), jnp.float32) * 0.02
    w2 = jax.random.normal(k_w2, (hidden_dim, output_dim), jnp.float32) * 0.02
    b2 = jax.random.normal(k_b2, (output_dim,), jnp.float32) * 0.02

    logits = bert_classification_head(last_hidden_state, w1, b1, w2, b2)
    jax.block_until_ready(logits)

    # Reference uses the same bf16-quantized activations (in f32 math), so the
    # only kernel-side error source is bf16 W1 on the MXU with f32 accumulate.
    expected = _reference(last_hidden_state.astype(jnp.float32), w1, b1, w2, b2)
    assert logits.shape == (batch, output_dim)
    assert jnp.allclose(logits, expected, atol=2e-2, rtol=2e-2), float(
        jnp.max(jnp.abs(logits - expected))
    )

    print("KERNEL_OK")
</pallas_src>

<mosaic_0001>
module attributes {stable_mosaic.version = 11 : i64} {
  func.func @_head_kernel(%arg0: i32, %arg1: memref<2x768xbf16, #tpu.memory_space<vmem>>, %arg2: memref<768x32xbf16, #tpu.memory_space<vmem>>, %arg3: memref<1x32xf32, #tpu.memory_space<vmem>>, %arg4: memref<32x4xf32, #tpu.memory_space<vmem>>, %arg5: memref<1x4xf32, #tpu.memory_space<vmem>>, %arg6: memref<2x4xf32, #tpu.memory_space<vmem>>) attributes {dimension_semantics = [#tpu.dimension_semantics<parallel>], iteration_bounds = array<i64: 1>, scalar_prefetch = 0 : i64, scratch_operands = 0 : i64, tpu.core_type = #tpu.core_type<tc>, window_params = [{transform_indices = @transform_0, window_bounds = array<i64: 2, 768>}, {pipeline_mode = #tpu.pipeline_mode<synchronous>, transform_indices = @transform_1, window_bounds = array<i64: 768, 32>}, {pipeline_mode = #tpu.pipeline_mode<synchronous>, transform_indices = @transform_2, window_bounds = array<i64: 1, 32>}, {pipeline_mode = #tpu.pipeline_mode<synchronous>, transform_indices = @transform_3, window_bounds = array<i64: 32, 4>}, {pipeline_mode = #tpu.pipeline_mode<synchronous>, transform_indices = @transform_4, window_bounds = array<i64: 1, 4>}, {transform_indices = @transform_5, window_bounds = array<i64: 2, 4>}]} {
    %c0 = arith.constant 0 : index
    %c0_0 = arith.constant 0 : index
    %0 = vector.load %arg1[%c0, %c0_0] : memref<2x768xbf16, #tpu.memory_space<vmem>>, vector<2x768xbf16>
    %c0_1 = arith.constant 0 : index
    %c0_2 = arith.constant 0 : index
    %1 = vector.load %arg2[%c0_1, %c0_2] : memref<768x32xbf16, #tpu.memory_space<vmem>>, vector<768x32xbf16>
    %cst = arith.constant dense<0.000000e+00> : vector<2x32xf32>
    %2 = tpu.matmul %0, %1, %cst {dimension_numbers = #tpu.dot_dimension_numbers<[1], [0], [0], [1], [0, 0, 1, 1], [], []>} : vector<2x768xbf16>, vector<768x32xbf16>, vector<2x32xf32> -> vector<2x32xf32>
    %c0_3 = arith.constant 0 : index
    %c0_4 = arith.constant 0 : index
    %3 = vector.load %arg3[%c0_3, %c0_4] : memref<1x32xf32, #tpu.memory_space<vmem>>, vector<1x32xf32>
    %4 = vector.broadcast %3 : vector<1x32xf32> to vector<2x32xf32>
    %5 = arith.addf %2, %4 : vector<2x32xf32>
    %cst_5 = arith.constant 0.000000e+00 : f32
    %6 = vector.broadcast %cst_5 : f32 to vector<2x32xf32>
    %7 = arith.maximumf %5, %6 : vector<2x32xf32>
    %c0_6 = arith.constant 0 : index
    %c0_7 = arith.constant 0 : index
    %8 = vector.load %arg4[%c0_6, %c0_7] : memref<32x4xf32, #tpu.memory_space<vmem>>, vector<32x4xf32>
    %cst_8 = arith.constant dense<0.000000e+00> : vector<2x4xf32>
    %9 = tpu.matmul %7, %8, %cst_8 {dimension_numbers = #tpu.dot_dimension_numbers<[1], [0], [0], [1], [0, 0, 1, 1], [], []>} : vector<2x32xf32>, vector<32x4xf32>, vector<2x4xf32> -> vector<2x4xf32>
    %c0_9 = arith.constant 0 : index
    %c0_10 = arith.constant 0 : index
    %10 = vector.load %arg5[%c0_9, %c0_10] : memref<1x4xf32, #tpu.memory_space<vmem>>, vector<1x4xf32>
    %11 = vector.broadcast %10 : vector<1x4xf32> to vector<2x4xf32>
    %12 = arith.addf %9, %11 : vector<2x4xf32>
    %c0_11 = arith.constant 0 : index
    %c0_12 = arith.constant 0 : index
    %13 = vector.load %arg6[%c0_11, %c0_12] : memref<2x4xf32, #tpu.memory_space<vmem>>, vector<2x4xf32>
    tpu.vector_store %arg6[%c0_11, %c0_12], %12 {strides = array<i32>} : memref<2x4xf32, #tpu.memory_space<vmem>>, vector<2x4xf32>,
    return
  }
  func.func @transform_0(%arg0: i32) -> (i32, i32) {
    %c0_i32 = arith.constant 0 : i32
    %c0_i32_0 = arith.constant 0 : i32
    return %arg0, %c0_i32 : i32, i32
  }
  func.func @transform_1(%arg0: i32) -> (i32, i32) {
    %c0_i32 = arith.constant 0 : i32
    %c0_i32_0 = arith.constant 0 : i32
    %c0_i32_1 = arith.constant 0 : i32
    return %c0_i32, %c0_i32_0 : i32, i32
  }
  func.func @transform_2(%arg0: i32) -> (i32, i32) {
    %c0_i32 = arith.constant 0 : i32
    %c0_i32_0 = arith.constant 0 : i32
    %c0_i32_1 = arith.constant 0 : i32
    return %c0_i32, %c0_i32_0 : i32, i32
  }
  func.func @transform_3(%arg0: i32) -> (i32, i32) {
    %c0_i32 = arith.constant 0 : i32
    %c0_i32_0 = arith.constant 0 : i32
    %c0_i32_1 = arith.constant 0 : i32
    return %c0_i32, %c0_i32_0 : i32, i32
  }
  func.func @transform_4(%arg0: i32) -> (i32, i32) {
    %c0_i32 = arith.constant 0 : i32
    %c0_i32_0 = arith.constant 0 : i32
    %c0_i32_1 = arith.constant 0 : i32
    return %c0_i32, %c0_i32_0 : i32, i32
  }
  func.func @transform_5(%arg0: i32) -> (i32, i32) {
    %c0_i32 = arith.constant 0 : i32
    %c0_i32_0 = arith.constant 0 : i32
    return %arg0, %c0_i32 : i32, i32
  }
}

</mosaic_0001>

<llo_original>
// kernel: bert_classification_head.1
$region0: #{bert_classification_head.1}
  #allocation0 [shape = 'u32[]', space=smem, size = 0x4, offset = 0x4, fixed_abs, tag = 'smem constant byte address 0x4 - core index']
  #allocation1 [shape = 'u32[72,128]{1,0:T(1,128)}', space=vmem, size = 0x9000, scoped, tag = 'internal scratch']
  %s0 = inlined_call_operand.vmem [shape: bf16[2,6144], index: 0, kind: input, shape index: {}]
  %s1 = inlined_call_operand.vmem [shape: bf16[768,32], index: 1, kind: input, shape index: {}]
  %s2 = inlined_call_operand.vmem [shape: f32[1,32], index: 2, kind: input, shape index: {}]
  %s3 = inlined_call_operand.vmem [shape: f32[32,4], index: 3, kind: input, shape index: {}]
  %s4 = inlined_call_operand.vmem [shape: f32[1,4], index: 4, kind: input, shape index: {}]
  %s5 = inlined_call_operand.hbm [shape: f32[2,4], index: 5, kind: output, shape index: {}]
  %s6 = sld [smem:[#allocation0]]
  $region30: #{bert_classification_head.1} parent=0
    _
  %s8 = ssub.s32 1, %s6
  %s9 = scalar_select 0, %s8, %s6
  $region1: #{bert_classification_head.1} parent=0
    #allocation2 [shape = 'u8[1024]{0}', space=vmem, size = 0x400, scoped, tag = 'output window, operand 0, single buffered']
    #allocation3 [shape = 's32[1]{0}', space=sflag, size = 0x4, scoped, tag = 'scoped memory for bert_classification_head.1']
    %10 = vsyncpa [#allocation3], 0
    // Predicated region
    $region2: #{bert_classification_head.1} parent=1 // pred_check
      _
    $region3: #{bert_classification_head.1} parent=1 // pred_check_branch
      %12 = sbr.rel (0) target = $region5
    $region4: #{bert_classification_head.1} parent=1 // pred_region
      _
    $region5: #{bert_classification_head.1} parent=1 // pred_fallthru
      _
    // Predicated region
    $region6: #{bert_classification_head.1} parent=1 // pred_check
      _
    $region7: #{bert_classification_head.1} parent=1 // pred_check_branch
      %14 = sbr.rel (0) target = $region9
    $region8: #{bert_classification_head.1} parent=1 // pred_region
      _
    $region9: #{bert_classification_head.1} parent=1 // pred_fallthru
      _
    // Predicated region
    $region10: #{bert_classification_head.1} parent=1 // pred_check
      _
    $region11: #{bert_classification_head.1} parent=1 // pred_check_branch
      %16 = sbr.rel (0) target = $region13
    $region12: #{bert_classification_head.1} parent=1 // pred_region
      _
    $region13: #{bert_classification_head.1} parent=1 // pred_fallthru
      _
    // Predicated region
    $region14: #{bert_classification_head.1} parent=1 // pred_check
      _
    $region15: #{bert_classification_head.1} parent=1 // pred_check_branch
      %18 = sbr.rel (0) target = $region17
    $region16: #{bert_classification_head.1} parent=1 // pred_region
      _
    $region17: #{bert_classification_head.1} parent=1 // pred_fallthru
      _
    // Predicated region
    $region18: #{bert_classification_head.1} parent=1 // pred_check
      _
    $region19: #{bert_classification_head.1} parent=1 // pred_check_branch
      %20 = sbr.rel (0) target = $region21
    $region20: #{bert_classification_head.1} parent=1 // pred_region
      _
    $region21: #{bert_classification_head.1} parent=1 // pred_fallthru
      _
    %v21 = vld [vmem:[%s0] sm:$0x3f]
    %v22 = vld [vmem:[%s1] sm:$0xf]
    %v23 = vld [vmem:[%s1 + $0x4] sm:$0xf]
    %v24 = vld [vmem:[%s1 + $0x8] sm:$0xf]
    %v25 = vld [vmem:[%s1 + $0xc] sm:$0xf]
    %v26 = vld [vmem:[%s1 + $0x10] sm:$0xf]
    %v27 = vld [vmem:[%s1 + $0x14] sm:$0xf]
    %v28 = vld [vmem:[%s1 + $0x18] sm:$0xf]
    %v29 = vld [vmem:[%s1 + $0x1c] sm:$0xf]
    %v30 = vld [vmem:[%s1 + $0x20] sm:$0xf]
    %v31 = vld [vmem:[%s1 + $0x24] sm:$0xf]
    %v32 = vld [vmem:[%s1 + $0x28] sm:$0xf]
    %v33 = vld [vmem:[%s1 + $0x2c] sm:$0xf]
    %v34 = vld [vmem:[%s1 + $0x30] sm:$0xf]
    %v35 = vld [vmem:[%s1 + $0x34] sm:$0xf]
    %v36 = vld [vmem:[%s1 + $0x38] sm:$0xf]
    %v37 = vld [vmem:[%s1 + $0x3c] sm:$0xf]
    %v38 = vld [vmem:[%s1 + $0x40] sm:$0xf]
    %v39 = vld [vmem:[%s1 + $0x44] sm:$0xf]
    %v40 = vld [vmem:[%s1 + $0x48] sm:$0xf]
    %v41 = vld [vmem:[%s1 + $0x4c] sm:$0xf]
    %v42 = vld [vmem:[%s1 + $0x50] sm:$0xf]
    %v43 = vld [vmem:[%s1 + $0x54] sm:$0xf]
    %v44 = vld [vmem:[%s1 + $0x58] sm:$0xf]
    %v45 = vld [vmem:[%s1 + $0x5c] sm:$0xf]
    %v46 = vld [vmem:[%s1 + $0x60] sm:$0xf]
    %v47 = vld [vmem:[%s1 + $0x64] sm:$0xf]
    %v48 = vld [vmem:[%s1 + $0x68] sm:$0xf]
    %v49 = vld [vmem:[%s1 + $0x6c] sm:$0xf]
    %v50 = vld [vmem:[%s1 + $0x70] sm:$0xf]
    %v51 = vld [vmem:[%s1 + $0x74] sm:$0xf]
    %v52 = vld [vmem:[%s1 + $0x78] sm:$0xf]
    %v53 = vld [vmem:[%s1 + $0x7c] sm:$0xf]
    %v54 = vld [vmem:[%s1 + $0x80] sm:$0xf]
    %v55 = vld [vmem:[%s1 + $0x84] sm:$0xf]
    %v56 = vld [vmem:[%s1 + $0x88] sm:$0xf]
    %v57 = vld [vmem:[%s1 + $0x8c] sm:$0xf]
    %v58 = vld [vmem:[%s1 + $0x90] sm:$0xf]
    %v59 = vld [vmem:[%s1 + $0x94] sm:$0xf]
    %v60 = vld [vmem:[%s1 + $0x98] sm:$0xf]
    %v61 = vld [vmem:[%s1 + $0x9c] sm:$0xf]
    %v62 = vld [vmem:[%s1 + $0xa0] sm:$0xf]
    %v63 = vld [vmem:[%s1 + $0xa4] sm:$0xf]
    %v64 = vld [vmem:[%s1 + $0xa8] sm:$0xf]
    %v65 = vld [vmem:[%s1 + $0xac] sm:$0xf]
    %v66 = vld [vmem:[%s1 + $0xb0] sm:$0xf]
    %v67 = vld [vmem:[%s1 + $0xb4] sm:$0xf]
    %v68 = vld [vmem:[%s1 + $0xb8] sm:$0xf]
    %v69 = vld [vmem:[%s1 + $0xbc] sm:$0xf]
    %v70 = vld [vmem:[%s1 + $0xc0] sm:$0xf]
    %v71 = vld [vmem:[%s1 + $0xc4] sm:$0xf]
    %v72 = vld [vmem:[%s1 + $0xc8] sm:$0xf]
    %v73 = vld [vmem:[%s1 + $0xcc] sm:$0xf]
    %v74 = vld [vmem:[%s1 + $0xd0] sm:$0xf]
    %v75 = vld [vmem:[%s1 + $0xd4] sm:$0xf]
    %v76 = vld [vmem:[%s1 + $0xd8] sm:$0xf]
    %v77 = vld [vmem:[%s1 + $0xdc] sm:$0xf]
    %v78 = vld [vmem:[%s1 + $0xe0] sm:$0xf]
    %v79 = vld [vmem:[%s1 + $0xe4] sm:$0xf]
    %v80 = vld [vmem:[%s1 + $0xe8] sm:$0xf]
    %v81 = vld [vmem:[%s1 + $0xec] sm:$0xf]
    %v82 = vld [vmem:[%s1 + $0xf0] sm:$0xf]
    %v83 = vld [vmem:[%s1 + $0xf4] sm:$0xf]
    %v84 = vld [vmem:[%s1 + $0xf8] sm:$0xf]
    %v85 = vld [vmem:[%s1 + $0xfc] sm:$0xf]
    %v86 = vld [vmem:[%s1 + $0x100] sm:$0xf]
    %v87 = vld [vmem:[%s1 + $0x104] sm:$0xf]
    %v88 = vld [vmem:[%s1 + $0x108] sm:$0xf]
    %v89 = vld [vmem:[%s1 + $0x10c] sm:$0xf]
    %v90 = vld [vmem:[%s1 + $0x110] sm:$0xf]
    %v91 = vld [vmem:[%s1 + $0x114] sm:$0xf]
    %v92 = vld [vmem:[%s1 + $0x118] sm:$0xf]
    %v93 = vld [vmem:[%s1 + $0x11c] sm:$0xf]
    %v94 = vld [vmem:[%s1 + $0x120] sm:$0xf]
    %v95 = vld [vmem:[%s1 + $0x124] sm:$0xf]
    %v96 = vld [vmem:[%s1 + $0x128] sm:$0xf]
    %v97 = vld [vmem:[%s1 + $0x12c] sm:$0xf]
    %v98 = vld [vmem:[%s1 + $0x130] sm:$0xf]
    %v99 = vld [vmem:[%s1 + $0x134] sm:$0xf]
    %v100 = vld [vmem:[%s1 + $0x138] sm:$0xf]
    %v101 = vld [vmem:[%s1 + $0x13c] sm:$0xf]
    %v102 = vld [vmem:[%s1 + $0x140] sm:$0xf]
    %v103 = vld [vmem:[%s1 + $0x144] sm:$0xf]
    %v104 = vld [vmem:[%s1 + $0x148] sm:$0xf]
    %v105 = vld [vmem:[%s1 + $0x14c] sm:$0xf]
    %v106 = vld [vmem:[%s1 + $0x150] sm:$0xf]
    %v107 = vld [vmem:[%s1 + $0x154] sm:$0xf]
    %v108 = vld [vmem:[%s1 + $0x158] sm:$0xf]
    %v109 = vld [vmem:[%s1 + $0x15c] sm:$0xf]
    %v110 = vld [vmem:[%s1 + $0x160] sm:$0xf]
    %v111 = vld [vmem:[%s1 + $0x164] sm:$0xf]
    %v112 = vld [vmem:[%s1 + $0x168] sm:$0xf]
    %v113 = vld [vmem:[%s1 + $0x16c] sm:$0xf]
    %v114 = vld [vmem:[%s1 + $0x170] sm:$0xf]
    %v115 = vld [vmem:[%s1 + $0x174] sm:$0xf]
    %v116 = vld [vmem:[%s1 + $0x178] sm:$0xf]
    %v117 = vld [vmem:[%s1 + $0x17c] sm:$0xf]
    %v118 = vld [vmem:[%s2] sm:$0x1]
    %v120 = vperm.slane %v118, 0
    %123 = vst [vmem:[#allocation1] ss:$9 sm:$0xff] %v21
    %v124 = vld [vmem:[#allocation1] sm:$0xff]
    %v125 = vld [vmem:[#allocation1 + $0x9] sm:$0xff]
    %v126 = vld [vmem:[#allocation1 + $0x12] sm:$0xff]
    %v127 = vld [vmem:[#allocation1 + $0x1b] sm:$0xff]
    %v128 = vld [vmem:[#allocation1 + $0x24] sm:$0xff]
    %v129 = vld [vmem:[#allocation1 + $0x2d] sm:$0xff]
    %v232 = vunpack.c.l.b16 %v22
    %v233 = vunpack.c.l.b16 %v23
    %v234 = vunpack.c.l.b16 %v24
    %v235 = vunpack.c.l.b16 %v25
    %v236 = vunpack.c.l.b16 %v26
    %v237 = vunpack.c.l.b16 %v27
    %v238 = vunpack.c.l.b16 %v28
    %v239 = vunpack.c.l.b16 %v29
    %v240 = vunpack.c.l.b16 %v30
    %v241 = vunpack.c.l.b16 %v31
    %v242 = vunpack.c.l.b16 %v32
    %v243 = vunpack.c.l.b16 %v33
    %v244 = vunpack.c.l.b16 %v34
    %v245 = vunpack.c.l.b16 %v35
    %v246 = vunpack.c.l.b16 %v36
    %v247 = vunpack.c.l.b16 %v37
    %v248 = vunpack.c.l.b16 %v38
    %v249 = vunpack.c.l.b16 %v39
    %v250 = vunpack.c.l.b16 %v40
    %v251 = vunpack.c.l.b16 %v41
    %v252 = vunpack.c.l.b16 %v42
    %v253 = vunpack.c.l.b16 %v43
    %v254 = vunpack.c.l.b16 %v44
    %v255 = vunpack.c.l.b16 %v45
    %v256 = vunpack.c.l.b16 %v46
    %v257 = vunpack.c.l.b16 %v47
    %v258 = vunpack.c.l.b16 %v48
    %v259 = vunpack.c.l.b16 %v49
    %v260 = vunpack.c.l.b16 %v50
    %v261 = vunpack.c.l.b16 %v51
    %v262 = vunpack.c.l.b16 %v52
    %v263 = vunpack.c.l.b16 %v53
    %v264 = vunpack.c.l.b16 %v54
    %v265 = vunpack.c.l.b16 %v55
    %v266 = vunpack.c.l.b16 %v56
    %v267 = vunpack.c.l.b16 %v57
    %v268 = vunpack.c.l.b16 %v58
    %v269 = vunpack.c.l.b16 %v59
    %v270 = vunpack.c.l.b16 %v60
    %v271 = vunpack.c.l.b16 %v61
    %v272 = vunpack.c.l.b16 %v62
    %v273 = vunpack.c.l.b16 %v63
    %v274 = vunpack.c.l.b16 %v64
    %v275 = vunpack.c.l.b16 %v65
    %v276 = vunpack.c.l.b16 %v66
    %v277 = vunpack.c.l.b16 %v67
    %v278 = vunpack.c.l.b16 %v68
    %v279 = vunpack.c.l.b16 %v69
    %v280 = vunpack.c.l.b16 %v70
    %v281 = vunpack.c.l.b16 %v71
    %v282 = vunpack.c.l.b16 %v72
    %v283 = vunpack.c.l.b16 %v73
    %v284 = vunpack.c.l.b16 %v74
    %v285 = vunpack.c.l.b16 %v75
    %v286 = vunpack.c.l.b16 %v76
    %v287 = vunpack.c.l.b16 %v77
    %v288 = vunpack.c.l.b16 %v78
    %v289 = vunpack.c.l.b16 %v79
    %v290 = vunpack.c.l.b16 %v80
    %v291 = vunpack.c.l.b16 %v81
    %v292 = vunpack.c.l.b16 %v82
    %v293 = vunpack.c.l.b16 %v83
    %v294 = vunpack.c.l.b16 %v84
    %v295 = vunpack.c.l.b16 %v85
    %v296 = vunpack.c.l.b16 %v86
    %v297 = vunpack.c.l.b16 %v87
    %v298 = vunpack.c.l.b16 %v88
    %v299 = vunpack.c.l.b16 %v89
    %v300 = vunpack.c.l.b16 %v90
    %v301 = vunpack.c.l.b16 %v91
    %v302 = vunpack.c.l.b16 %v92
    %v303 = vunpack.c.l.b16 %v93
    %v304 = vunpack.c.l.b16 %v94
    %v305 = vunpack.c.l.b16 %v95
    %v306 = vunpack.c.l.b16 %v96
    %v307 = vunpack.c.l.b16 %v97
    %v308 = vunpack.c.l.b16 %v98
    %v309 = vunpack.c.l.b16 %v99
    %v310 = vunpack.c.l.b16 %v100
    %v311 = vunpack.c.l.b16 %v101
    %v312 = vunpack.c.l.b16 %v102
    %v313 = vunpack.c.l.b16 %v103
    %v314 = vunpack.c.l.b16 %v104
    %v315 = vunpack.c.l.b16 %v105
    %v316 = vunpack.c.l.b16 %v106
    %v317 = vunpack.c.l.b16 %v107
    %v318 = vunpack.c.l.b16 %v108
    %v319 = vunpack.c.l.b16 %v109
    %v320 = vunpack.c.l.b16 %v110
    %v321 = vunpack.c.l.b16 %v111
    %v322 = vunpack.c.l.b16 %v112
    %v323 = vunpack.c.l.b16 %v113
    %v324 = vunpack.c.l.b16 %v114
    %v325 = vunpack.c.l.b16 %v115
    %v326 = vunpack.c.l.b16 %v116
    %v327 = vunpack.c.l.b16 %v117
    %v328 = vpack.c.b16 %v233, %v232
    %v329 = vpack.c.b16 %v235, %v234
    %v330 = vpack.c.b16 %v237, %v236
    %v331 = vpack.c.b16 %v239, %v238
    %v332 = vpack.c.b16 %v241, %v240
    %v333 = vpack.c.b16 %v243, %v242
    %v334 = vpack.c.b16 %v245, %v244
    %v335 = vpack.c.b16 %v247, %v246
    %v336 = vpack.c.b16 %v249, %v248
    %v337 = vpack.c.b16 %v251, %v250
    %v338 = vpack.c.b16 %v253, %v252
    %v339 = vpack.c.b16 %v255, %v254
    %v340 = vpack.c.b16 %v257, %v256
    %v341 = vpack.c.b16 %v259, %v258
    %v342 = vpack.c.b16 %v261, %v260
    %v343 = vpack.c.b16 %v263, %v262
    %v344 = vpack.c.b16 %v265, %v264
    %v345 = vpack.c.b16 %v267, %v266
    %v346 = vpack.c.b16 %v269, %v268
    %v347 = vpack.c.b16 %v271, %v270
    %v348 = vpack.c.b16 %v273, %v272
    %v349 = vpack.c.b16 %v275, %v274
    %v350 = vpack.c.b16 %v277, %v276
    %v351 = vpack.c.b16 %v279, %v278
    %v352 = vpack.c.b16 %v281, %v280
    %v353 = vpack.c.b16 %v283, %v282
    %v354 = vpack.c.b16 %v285, %v284
    %v355 = vpack.c.b16 %v287, %v286
    %v356 = vpack.c.b16 %v289, %v288
    %v357 = vpack.c.b16 %v291, %v290
    %v358 = vpack.c.b16 %v293, %v292
    %v359 = vpack.c.b16 %v295, %v294
    %v360 = vpack.c.b16 %v297, %v296
    %v361 = vpack.c.b16 %v299, %v298
    %v362 = vpack.c.b16 %v301, %v300
    %v363 = vpack.c.b16 %v303, %v302
    %v364 = vpack.c.b16 %v305, %v304
    %v365 = vpack.c.b16 %v307, %v306
    %v366 = vpack.c.b16 %v309, %v308
    %v367 = vpack.c.b16 %v311, %v310
    %v368 = vpack.c.b16 %v313, %v312
    %v369 = vpack.c.b16 %v315, %v314
    %v370 = vpack.c.b16 %v317, %v316
    %v371 = vpack.c.b16 %v319, %v318
    %v372 = vpack.c.b16 %v321, %v320
    %v373 = vpack.c.b16 %v323, %v322
    %v374 = vpack.c.b16 %v325, %v324
    %v375 = vpack.c.b16 %v327, %v326
    %424 = vmatpush.bf16.msra.mxu0 %v335
    %425 = vmatpush.bf16.msra.mxu0 %v334
    %426 = vmatpush.bf16.msra.mxu0 %v333
    %427 = vmatpush.bf16.msra.mxu0 %v332
    %428 = vmatpush.bf16.msra.mxu0 %v331
    %429 = vmatpush.bf16.msra.mxu0 %v330
    %430 = vmatpush.bf16.msra.mxu0 %v329
    %431 = vmatpush.bf16.msra.mxu0 %v328
    %432 = vmatmul.bf16.gmra.mxu0 %v124
    %v433 = vpop.f32.mrf.mxu0
    %v434 = vadd.f32 %v120, %v433
    %v435 = vpop.f32.mrf.mxu0
    %436 = vdwg.mxu0
    %437 = vmatpush.bf16.msra.mxu0 %v343
    %438 = vmatpush.bf16.msra.mxu0 %v342
    %439 = vmatpush.bf16.msra.mxu0 %v341
    %440 = vmatpush.bf16.msra.mxu0 %v340
    %441 = vmatpush.bf16.msra.mxu0 %v339
    %442 = vmatpush.bf16.msra.mxu0 %v338
    %443 = vmatpush.bf16.msra.mxu0 %v337
    %444 = vmatpush.bf16.msra.mxu0 %v336
    %445 = vmatmul.bf16.gmra.mxu0 %v125
    %v446 = vpop.f32.mrf.mxu0
    %v447 = vadd.f32 %v434, %v446
    %v448 = vpop.f32.mrf.mxu0
    %449 = vdwg.mxu0
    %450 = vmatpush.bf16.msra.mxu0 %v351
    %451 = vmatpush.bf16.msra.mxu0 %v350
    %452 = vmatpush.bf16.msra.mxu0 %v349
    %453 = vmatpush.bf16.msra.mxu0 %v348
    %454 = vmatpush.bf16.msra.mxu0 %v347
    %455 = vmatpush.bf16.msra.mxu0 %v346
    %456 = vmatpush.bf16.msra.mxu0 %v345
    %457 = vmatpush.bf16.msra.mxu0 %v344
    %458 = vmatmul.bf16.gmra.mxu0 %v126
    %v459 = vpop.f32.mrf.mxu0
    %v460 = vadd.f32 %v447, %v459
    %v461 = vpop.f32.mrf.mxu0
    %462 = vdwg.mxu0
    %463 = vmatpush.bf16.msra.mxu0 %v359
    %464 = vmatpush.bf16.msra.mxu0 %v358
    %465 = vmatpush.bf16.msra.mxu0 %v357
    %466 = vmatpush.bf16.msra.mxu0 %v356
    %467 = vmatpush.bf16.msra.mxu0 %v355
    %468 = vmatpush.bf16.msra.mxu0 %v354
    %469 = vmatpush.bf16.msra.mxu0 %v353
    %470 = vmatpush.bf16.msra.mxu0 %v352
    %471 = vmatmul.bf16.gmra.mxu0 %v127
    %v472 = vpop.f32.mrf.mxu0
    %v473 = vadd.f32 %v460, %v472
    %v474 = vpop.f32.mrf.mxu0
    %475 = vdwg.mxu0
    %476 = vmatpush.bf16.msra.mxu0 %v367
    %477 = vmatpush.bf16.msra.mxu0 %v366
    %478 = vmatpush.bf16.msra.mxu0 %v365
    %479 = vmatpush.bf16.msra.mxu0 %v364
    %480 = vmatpush.bf16.msra.mxu0 %v363
    %481 = vmatpush.bf16.msra.mxu0 %v362
    %482 = vmatpush.bf16.msra.mxu0 %v361
    %483 = vmatpush.bf16.msra.mxu0 %v360
    %484 = vmatmul.bf16.gmra.mxu0 %v128
    %v485 = vpop.f32.mrf.mxu0
    %v486 = vadd.f32 %v473, %v485
    %v487 = vpop.f32.mrf.mxu0
    %488 = vdwg.mxu0
    %489 = vmatpush.bf16.msra.mxu0 %v375
    %490 = vmatpush.bf16.msra.mxu0 %v374
    %491 = vmatpush.bf16.msra.mxu0 %v373
    %492 = vmatpush.bf16.msra.mxu0 %v372
    %493 = vmatpush.bf16.msra.mxu0 %v371
    %494 = vmatpush.bf16.msra.mxu0 %v370
    %495 = vmatpush.bf16.msra.mxu0 %v369
    %496 = vmatpush.bf16.msra.mxu0 %v368
    %497 = vmatmul.bf16.gmra.mxu0 %v129
    %v498 = vpop.f32.mrf.mxu0
    %v499 = vadd.f32 %v486, %v498
    %v500 = vpop.f32.mrf.mxu0
    %501 = vdwg.mxu0
    %v502 = vmax.f32 %v499, 0.0
    %v503 = vld [vmem:[%s3] sm:$0xff]
    %v504 = vld [vmem:[%s3 + $0x8] sm:$0xff]
    %v505 = vld [vmem:[%s3 + $0x10] sm:$0xff]
    %v506 = vld [vmem:[%s3 + $0x18] sm:$0xff]
    %v507 = vld [vmem:[%s4] sm:$0x1]
    %v509 = vperm.slane %v507, 0
    %vm511 = vcmask 261120
    %v513 = vsel %vm511, %v502, 0
    %515 = vmatpush.msra.mxu0 0.0
    %516 = vmatpush.msra.mxu0 0.0
    %517 = vmatpush.msra.mxu0 0.0
    %518 = vmatpush.msra.mxu0 0.0
    %519 = vmatpush.msra.mxu0 0.0
    %520 = vmatpush.msra.mxu0 0.0
    %521 = vmatpush.msra.mxu0 0.0
    %522 = vmatpush.msra.mxu0 0.0
    %523 = vmatpush.msra.mxu0 0.0
    %524 = vmatpush.msra.mxu0 0.0
    %525 = vmatpush.msra.mxu0 0.0
    %526 = vmatpush.msra.mxu0 0.0
    %527 = vmatpush.msra.mxu0 %v506
    %528 = vmatpush.msra.mxu0 %v505
    %529 = vmatpush.msra.mxu0 %v504
    %530 = vmatpush.msra.mxu0 %v503
    %531 = vmatmul.f32.gmra.mxu0 %v513
    %v532 = vpop.f32.mrf.mxu0
    %v533 = vadd.f32 %v509, %v532
    %534 = vdwg.mxu0
    %vm535 = vcmask 25600
    %536 = vst.msk [vmem:[#allocation2] sm:$0x3] %vm535, %v533
    // Predicated region
    $region22: #{bert_classification_head.1} parent=1 // pred_check
      _
    $region23: #{bert_classification_head.1} parent=1 // pred_check_branch
      %538 = sbr.rel (0) target = $region25
    $region24: #{bert_classification_head.1} parent=1 // pred_region
      %540 = vsyncadd [#allocation3], 0
      %s542 = sshll.u32 [#allocation2], 4
      %s543 = int_to_ptr.vmem [resolvable:$true] %s542
      %s544 = sshll.u32 %s5, 4
      %s545 = int_to_ptr.hbm [resolvable:$true] %s544
      %547 = dma.vmem_to_hbm [thread:$0]  %s543, 32, %s545, [#allocation3]
    $region25: #{bert_classification_head.1} parent=1 // pred_fallthru
      _
    // Predicated region
    $region26: #{bert_classification_head.1} parent=1 // pred_check
      _
    $region27: #{bert_classification_head.1} parent=1 // pred_check_branch
      %549 = sbr.rel (0) target = $region29
    $region28: #{bert_classification_head.1} parent=1 // pred_region
      %551 = dma.done [#allocation3], 32
    $region29: #{bert_classification_head.1} parent=1 // pred_fallthru
      _
    %552 = vsyncpa [#allocation3], 1

</llo_original>
